<compile_context>
chip_gen: v7x
topology: tpu7x:2x2x1
jax: 0.10.0
libtpu: 0.0.40
codegen_flags: <defaults>
</compile_context>

<pallas_src>
import functools

import jax
import jax.numpy as jnp
from jax.experimental import pallas as pl
from jax.experimental.pallas import tpu as pltpu


def _round_up(x, m):
    return ((x + m - 1) // m) * m


def _self_output_kernel(h_ref, res_ref, w_ref, b_ref, gamma_ref, beta_ref, o_ref, *, eps):
    # h_ref:     (TM, H)  hidden_states tile (native dtype, fed straight to the MXU)
    # res_ref:   (TM, H)  input_tensor (residual) tile
    # w_ref:     (H, H)   dense weight (transposed, in-features x out-features), VMEM-resident
    # b_ref:     (1, H)   dense bias
    # gamma_ref: (1, H)   LayerNorm weight
    # beta_ref:  (1, H)   LayerNorm bias

    # Dense (MXU matmul) with f32 accumulation; no pre-cast of the operands.
    y = jnp.dot(h_ref[...], w_ref[...], preferred_element_type=jnp.float32)

    # Dropout: identity in eval mode (PyTorch nn.Dropout at inference).
    # TODO(synk): training-mode dropout would use pltpu.prng_seed / prng_random_bits.

    # Fused bias + residual add (single full-tile add against y).
    y = y + (res_ref[...].astype(jnp.float32) + b_ref[...].astype(jnp.float32))

    # LayerNorm over the hidden (lane) axis — one-pass statistics, eps inside rsqrt.
    inv_h = 1.0 / y.shape[-1]
    sum_y = jnp.sum(y, axis=-1, keepdims=True)
    sum_y2 = jnp.sum(y * y, axis=-1, keepdims=True)
    u = sum_y * inv_h
    s = jnp.maximum(sum_y2 * inv_h - u * u, 0.0)  # guard tiny negative from rounding
    xn = (y - u) * jax.lax.rsqrt(s + eps)

    out = xn * gamma_ref[...].astype(jnp.float32) + beta_ref[...].astype(jnp.float32)
    o_ref[...] = out.astype(o_ref.dtype)


def self_output(hidden_states, input_tensor, w, b, gamma, beta, *, eps=1e-12, tm=256):
    """hidden_states, input_tensor: (B, S, H); w: (H, H) [in, out]; b/gamma/beta: (H,).

    tm: token-tile size. 256 targets the 2x256 MXU on v6e/v7x; use 128 on v5e.
    """
    B, S, H = hidden_states.shape
    M = B * S

    # Token-tile size: clamp for toy shapes, keep sublane-aligned (8 for f32, 16 for bf16 ok).
    tm = int(min(tm, _round_up(M, 8)))
    M_pad = _round_up(M, tm)

    h2 = hidden_states.reshape(M, H)
    r2 = input_tensor.reshape(M, H)
    if M_pad != M:
        pad = M_pad - M
        h2 = jnp.pad(h2, ((0, pad), (0, 0)))
        r2 = jnp.pad(r2, ((0, pad), (0, 0)))

    b2 = b.reshape(1, H)
    g2 = gamma.reshape(1, H)
    be2 = beta.reshape(1, H)

    # Explicit VMEM budget: weight resident + double-buffered (h, res, out) tiles + params.
    act_sz = h2.dtype.itemsize
    out_sz = hidden_states.dtype.itemsize
    needed = (
        2 * 2 * tm * H * act_sz      # double-buffered h + res tiles
        + 2 * tm * H * out_sz        # double-buffered out tile
        + 2 * H * H * w.dtype.itemsize  # weight (counted double-buffered, conservative)
        + 8 * H * 4                  # bias / gamma / beta
    )
    vmem_limit = int(min(max(2 * needed, 32 * 1024 * 1024), 64 * 1024 * 1024))

    kernel = functools.partial(_self_output_kernel, eps=eps)

    out = pl.pallas_call(
        kernel,
        out_shape=jax.ShapeDtypeStruct((M_pad, H), hidden_states.dtype),
        grid=(pl.cdiv(M_pad, tm),),
        in_specs=[
            pl.BlockSpec((tm, H), lambda i: (i, 0)),   # hidden_states tile
            pl.BlockSpec((tm, H), lambda i: (i, 0)),   # residual tile
            pl.BlockSpec((H, H), lambda i: (0, 0)),    # weight, VMEM-resident
            pl.BlockSpec((1, H), lambda i: (0, 0)),    # bias
            pl.BlockSpec((1, H), lambda i: (0, 0)),    # gamma
            pl.BlockSpec((1, H), lambda i: (0, 0)),    # beta
        ],
        out_specs=pl.BlockSpec((tm, H), lambda i: (i, 0)),
        compiler_params=pltpu.CompilerParams(
            dimension_semantics=("parallel",),
            vmem_limit_bytes=vmem_limit,
        ),
    )(h2, r2, w, b2, g2, be2)

    return out[:M].reshape(B, S, H)


def self_output_ref(hidden_states, input_tensor, w, b, gamma, beta, eps=1e-12):
    y = jnp.einsum("bsh,ho->bso", hidden_states, w) + b
    y = y + input_tensor
    u = jnp.mean(y, axis=-1, keepdims=True)
    s = jnp.mean((y - u) ** 2, axis=-1, keepdims=True)
    xn = (y - u) / jnp.sqrt(s + eps)
    return gamma * xn + beta


if __name__ == "__main__":
    B, S, H = 2, 8, 32
    key = jax.random.PRNGKey(0)
    k1, k2, k3, k4, k5, k6 = jax.random.split(key, 6)

    hidden_states = jax.random.normal(k1, (B, S, H), dtype=jnp.float32)
    input_tensor = jax.random.normal(k2, (B, S, H), dtype=jnp.float32)

    # nn.Linear(H, H)-style deterministic init (uniform in +-1/sqrt(H)),
    # stored pre-transposed as (in, out) for x @ W.
    bound = 1.0 / (H ** 0.5)
    w = jax.random.uniform(k3, (H, H), minval=-bound, maxval=bound, dtype=jnp.float32)
    b = jax.random.uniform(k4, (H,), minval=-bound, maxval=bound, dtype=jnp.float32)
    # LayerNorm params: ones / zeros as in the module __init__.
    gamma = jnp.ones((H,), dtype=jnp.float32)
    beta = jnp.zeros((H,), dtype=jnp.float32)

    out = self_output(hidden_states, input_tensor, w, b, gamma, beta)
    out = jax.block_until_ready(out)

    ref = self_output_ref(hidden_states, input_tensor, w, b, gamma, beta)
    assert out.shape == (B, S, H)
    assert jnp.allclose(out, ref, atol=2e-5, rtol=2e-5), float(jnp.max(jnp.abs(out - ref)))

    # Exercise the token-padding path (M not a multiple of the tile size).
    B2, S2 = 2, 5
    hs2 = jax.random.normal(k5, (B2, S2, H), dtype=jnp.float32)
    it2 = jax.random.normal(k6, (B2, S2, H), dtype=jnp.float32)
    out2 = jax.block_until_ready(self_output(hs2, it2, w, b, gamma, beta))
    ref2 = self_output_ref(hs2, it2, w, b, gamma, beta)
    assert out2.shape == (B2, S2, H)
    assert jnp.allclose(out2, ref2, atol=2e-5, rtol=2e-5), float(jnp.max(jnp.abs(out2 - ref2)))

    print("KERNEL_OK")
</pallas_src>

<mosaic_0001>
module attributes {stable_mosaic.version = 11 : i64} {
  func.func @_self_output_kernel(%arg0: i32, %arg1: memref<16x32xf32, #tpu.memory_space<vmem>>, %arg2: memref<16x32xf32, #tpu.memory_space<vmem>>, %arg3: memref<32x32xf32, #tpu.memory_space<vmem>>, %arg4: memref<1x32xf32, #tpu.memory_space<vmem>>, %arg5: memref<1x32xf32, #tpu.memory_space<vmem>>, %arg6: memref<1x32xf32, #tpu.memory_space<vmem>>, %arg7: memref<16x32xf32, #tpu.memory_space<vmem>>) attributes {dimension_semantics = [#tpu.dimension_semantics<parallel>], iteration_bounds = array<i64: 1>, scalar_prefetch = 0 : i64, scratch_operands = 0 : i64, tpu.core_type = #tpu.core_type<tc>, window_params = [{transform_indices = @transform_0, window_bounds = array<i64: 16, 32>}, {transform_indices = @transform_1, window_bounds = array<i64: 16, 32>}, {pipeline_mode = #tpu.pipeline_mode<synchronous>, transform_indices = @transform_2, window_bounds = array<i64: 32, 32>}, {pipeline_mode = #tpu.pipeline_mode<synchronous>, transform_indices = @transform_3, window_bounds = array<i64: 1, 32>}, {pipeline_mode = #tpu.pipeline_mode<synchronous>, transform_indices = @transform_4, window_bounds = array<i64: 1, 32>}, {pipeline_mode = #tpu.pipeline_mode<synchronous>, transform_indices = @transform_5, window_bounds = array<i64: 1, 32>}, {transform_indices = @transform_6, window_bounds = array<i64: 16, 32>}]} {
    %c0 = arith.constant 0 : index
    %c0_0 = arith.constant 0 : index
    %0 = vector.load %arg1[%c0, %c0_0] : memref<16x32xf32, #tpu.memory_space<vmem>>, vector<16x32xf32>
    %c0_1 = arith.constant 0 : index
    %c0_2 = arith.constant 0 : index
    %1 = vector.load %arg3[%c0_1, %c0_2] : memref<32x32xf32, #tpu.memory_space<vmem>>, vector<32x32xf32>
    %cst = arith.constant dense<0.000000e+00> : vector<16x32xf32>
    %2 = tpu.matmul %0, %1, %cst {dimension_numbers = #tpu.dot_dimension_numbers<[1], [0], [0], [1], [0, 0, 1, 1], [], []>} : vector<16x32xf32>, vector<32x32xf32>, vector<16x32xf32> -> vector<16x32xf32>
    %c0_3 = arith.constant 0 : index
    %c0_4 = arith.constant 0 : index
    %3 = vector.load %arg2[%c0_3, %c0_4] : memref<16x32xf32, #tpu.memory_space<vmem>>, vector<16x32xf32>
    %c0_5 = arith.constant 0 : index
    %c0_6 = arith.constant 0 : index
    %4 = vector.load %arg4[%c0_5, %c0_6] : memref<1x32xf32, #tpu.memory_space<vmem>>, vector<1x32xf32>
    %5 = vector.broadcast %4 : vector<1x32xf32> to vector<16x32xf32>
    %6 = arith.addf %3, %5 : vector<16x32xf32>
    %7 = arith.addf %2, %6 : vector<16x32xf32>
    %cst_7 = arith.constant dense<0.000000e+00> : vector<16xf32>
    %8 = vector.multi_reduction <add>, %7, %cst_7 [1] : vector<16x32xf32> to vector<16xf32>
    %9 = vector.shape_cast %8 : vector<16xf32> to vector<16x1xf32>
    %10 = arith.mulf %7, %7 : vector<16x32xf32>
    %cst_8 = arith.constant dense<0.000000e+00> : vector<16xf32>
    %11 = vector.multi_reduction <add>, %10, %cst_8 [1] : vector<16x32xf32> to vector<16xf32>
    %12 = vector.shape_cast %11 : vector<16xf32> to vector<16x1xf32>
    %cst_9 = arith.constant 3.125000e-02 : f32
    %13 = vector.broadcast %cst_9 : f32 to vector<16x1xf32>
    %14 = arith.mulf %9, %13 : vector<16x1xf32>
    %cst_10 = arith.constant 3.125000e-02 : f32
    %15 = vector.broadcast %cst_10 : f32 to vector<16x1xf32>
    %16 = arith.mulf %12, %15 : vector<16x1xf32>
    %17 = arith.mulf %14, %14 : vector<16x1xf32>
    %18 = arith.subf %16, %17 : vector<16x1xf32>
    %cst_11 = arith.constant 0.000000e+00 : f32
    %19 = vector.broadcast %cst_11 : f32 to vector<16x1xf32>
    %20 = arith.maximumf %18, %19 : vector<16x1xf32>
    %21 = vector.broadcast %14 : vector<16x1xf32> to vector<16x32xf32>
    %22 = arith.subf %7, %21 : vector<16x32xf32>
    %cst_12 = arith.constant 9.99999996E-13 : f32
    %23 = vector.broadcast %cst_12 : f32 to vector<16x1xf32>
    %24 = arith.addf %20, %23 : vector<16x1xf32>
    %25 = math.rsqrt %24 : vector<16x1xf32>
    %26 = vector.broadcast %25 : vector<16x1xf32> to vector<16x32xf32>
    %27 = arith.mulf %22, %26 : vector<16x32xf32>
    %c0_13 = arith.constant 0 : index
    %c0_14 = arith.constant 0 : index
    %28 = vector.load %arg5[%c0_13, %c0_14] : memref<1x32xf32, #tpu.memory_space<vmem>>, vector<1x32xf32>
    %29 = vector.broadcast %28 : vector<1x32xf32> to vector<16x32xf32>
    %30 = arith.mulf %27, %29 : vector<16x32xf32>
    %c0_15 = arith.constant 0 : index
    %c0_16 = arith.constant 0 : index
    %31 = vector.load %arg6[%c0_15, %c0_16] : memref<1x32xf32, #tpu.memory_space<vmem>>, vector<1x32xf32>
    %32 = vector.broadcast %31 : vector<1x32xf32> to vector<16x32xf32>
    %33 = arith.addf %30, %32 : vector<16x32xf32>
    %c0_17 = arith.constant 0 : index
    %c0_18 = arith.constant 0 : index
    %34 = vector.load %arg7[%c0_17, %c0_18] : memref<16x32xf32, #tpu.memory_space<vmem>>, vector<16x32xf32>
    tpu.vector_store %arg7[%c0_17, %c0_18], %33 {strides = array<i32>} : memref<16x32xf32, #tpu.memory_space<vmem>>, vector<16x32xf32>,
    return
  }
  func.func @transform_0(%arg0: i32) -> (i32, i32) {
    %c0_i32 = arith.constant 0 : i32
    %c0_i32_0 = arith.constant 0 : i32
    return %arg0, %c0_i32 : i32, i32
  }
  func.func @transform_1(%arg0: i32) -> (i32, i32) {
    %c0_i32 = arith.constant 0 : i32
    %c0_i32_0 = arith.constant 0 : i32
    return %arg0, %c0_i32 : i32, i32
  }
  func.func @transform_2(%arg0: i32) -> (i32, i32) {
    %c0_i32 = arith.constant 0 : i32
    %c0_i32_0 = arith.constant 0 : i32
    %c0_i32_1 = arith.constant 0 : i32
    return %c0_i32, %c0_i32_0 : i32, i32
  }
  func.func @transform_3(%arg0: i32) -> (i32, i32) {
    %c0_i32 = arith.constant 0 : i32
    %c0_i32_0 = arith.constant 0 : i32
    %c0_i32_1 = arith.constant 0 : i32
    return %c0_i32, %c0_i32_0 : i32, i32
  }
  func.func @transform_4(%arg0: i32) -> (i32, i32) {
    %c0_i32 = arith.constant 0 : i32
    %c0_i32_0 = arith.constant 0 : i32
    %c0_i32_1 = arith.constant 0 : i32
    return %c0_i32, %c0_i32_0 : i32, i32
  }
  func.func @transform_5(%arg0: i32) -> (i32, i32) {
    %c0_i32 = arith.constant 0 : i32
    %c0_i32_0 = arith.constant 0 : i32
    %c0_i32_1 = arith.constant 0 : i32
    return %c0_i32, %c0_i32_0 : i32, i32
  }
  func.func @transform_6(%arg0: i32) -> (i32, i32) {
    %c0_i32 = arith.constant 0 : i32
    %c0_i32_0 = arith.constant 0 : i32
    return %arg0, %c0_i32 : i32, i32
  }
}

</mosaic_0001>

<llo_original>
// kernel: tpu_custom_call.1
$region0: #{tpu_custom_call.1}
  #allocation0 [shape = 'u32[]', space=smem, size = 0x4, offset = 0x4, fixed_abs, tag = 'smem constant byte address 0x4 - core index']
  #allocation1 [shape = 'u32[144,128]{1,0:T(1,128)}', space=vmem, size = 0x12000, scoped, tag = 'internal scratch']
  %s0 = inlined_call_operand.hbm [shape: f32[16,32], index: 0, kind: input, shape index: {}]
  %s1 = inlined_call_operand.hbm [shape: f32[16,32], index: 1, kind: input, shape index: {}]
  %s2 = inlined_call_operand.hbm [shape: f32[32,32], index: 2, kind: input, shape index: {}]
  %s3 = inlined_call_operand.vmem [shape: f32[1,32], index: 3, kind: input, shape index: {}]
  %s4 = inlined_call_operand.vmem [shape: f32[1,32], index: 4, kind: input, shape index: {}]
  %s5 = inlined_call_operand.vmem [shape: f32[1,32], index: 5, kind: input, shape index: {}]
  %s6 = inlined_call_operand.hbm [shape: f32[16,32], index: 6, kind: output, shape index: {}]
  %s7 = sld [smem:[#allocation0]]
  $region46: #{tpu_custom_call.1} parent=0
    _
  %s9 = ssub.s32 1, %s7
  %s10 = scalar_select 0, %s9, %s7
  $region1: #{tpu_custom_call.1} parent=0
    #allocation2 [shape = 'u8[8192]{0}', space=vmem, size = 0x2000, scoped, tag = 'input window, operand 0, single buffered']
    #allocation3 [shape = 's32[1]{0}', space=sflag, size = 0x4, scoped, tag = 'scoped memory for tpu_custom_call.1']
    #allocation4 [shape = 's32[1]{0}', space=sflag, size = 0x4, scoped, tag = 'scoped memory for tpu_custom_call.1']
    #allocation5 [shape = 'u8[8192]{0}', space=vmem, size = 0x2000, scoped, tag = 'input window, operand 1, single buffered']
    #allocation6 [shape = 's32[1]{0}', space=sflag, size = 0x4, scoped, tag = 'scoped memory for tpu_custom_call.1']
    #allocation7 [shape = 'u8[16384]{0}', space=vmem, size = 0x4000, scoped, tag = 'input window, operand 2, single buffered']
    #allocation8 [shape = 'u8[8192]{0}', space=vmem, size = 0x2000, scoped, tag = 'output window, operand 0, single buffered']
    %11 = vsyncpa [#allocation3], 0
    %12 = vsyncpa [#allocation6], 0
    %13 = vsyncpa [#allocation4], 0
    // Predicated region
    $region2: #{tpu_custom_call.1} parent=1 // pred_check
      _
    $region3: #{tpu_custom_call.1} parent=1 // pred_check_branch
      %15 = sbr.rel (0) target = $region5
    $region4: #{tpu_custom_call.1} parent=1 // pred_region
      %s17 = ssub.s32 256, 256
      %18 = vsyncadd [#allocation3], %s17
      %s19 = sshll.u32 [#allocation2], 4
      %s20 = int_to_ptr.vmem [resolvable:$true] %s19
      %25 = dma.hbm_to_vmem [thread:$0]  %s0, 256, %s20, [#allocation3], 128, 128, 8
    $region5: #{tpu_custom_call.1} parent=1 // pred_fallthru
      _
    // Predicated region
    $region6: #{tpu_custom_call.1} parent=1 // pred_check
      _
    $region7: #{tpu_custom_call.1} parent=1 // pred_check_branch
      %27 = sbr.rel (0) target = $region9
    $region8: #{tpu_custom_call.1} parent=1 // pred_region
      %s29 = ssub.s32 256, 256
      %30 = vsyncadd [#allocation6], %s29
      %s31 = sshll.u32 [#allocation5], 4
      %s32 = int_to_ptr.vmem [resolvable:$true] %s31
      %37 = dma.hbm_to_vmem [thread:$0]  %s1, 256, %s32, [#allocation6], 128, 128, 8
    $region9: #{tpu_custom_call.1} parent=1 // pred_fallthru
      _
    // Predicated region
    $region10: #{tpu_custom_call.1} parent=1 // pred_check
      _
    $region11: #{tpu_custom_call.1} parent=1 // pred_check_branch
      %39 = sbr.rel (0) target = $region13
    $region12: #{tpu_custom_call.1} parent=1 // pred_region
      %s41 = ssub.s32 512, 512
      %42 = vsyncadd [#allocation6], %s41
      %s43 = sshll.u32 [#allocation7], 4
      %s44 = int_to_ptr.vmem [resolvable:$true] %s43
      %49 = dma.hbm_to_vmem [thread:$0]  %s2, 512, %s44, [#allocation6], 128, 128, 8
    $region13: #{tpu_custom_call.1} parent=1 // pred_fallthru
      _
    // Predicated region
    $region14: #{tpu_custom_call.1} parent=1 // pred_check
      _
    $region15: #{tpu_custom_call.1} parent=1 // pred_check_branch
      %51 = sbr.rel (0) target = $region17
    $region16: #{tpu_custom_call.1} parent=1 // pred_region
      _
    $region17: #{tpu_custom_call.1} parent=1 // pred_fallthru
      _
    // Predicated region
    $region18: #{tpu_custom_call.1} parent=1 // pred_check
      _
    $region19: #{tpu_custom_call.1} parent=1 // pred_check_branch
      %53 = sbr.rel (0) target = $region21
    $region20: #{tpu_custom_call.1} parent=1 // pred_region
      _
    $region21: #{tpu_custom_call.1} parent=1 // pred_fallthru
      _
    // Predicated region
    $region22: #{tpu_custom_call.1} parent=1 // pred_check
      _
    $region23: #{tpu_custom_call.1} parent=1 // pred_check_branch
      %55 = sbr.rel (0) target = $region25
    $region24: #{tpu_custom_call.1} parent=1 // pred_region
      _
    $region25: #{tpu_custom_call.1} parent=1 // pred_fallthru
      _
    // Predicated region
    $region26: #{tpu_custom_call.1} parent=1 // pred_check
      _
    $region27: #{tpu_custom_call.1} parent=1 // pred_check_branch
      %57 = sbr.rel (0) target = $region29
    $region28: #{tpu_custom_call.1} parent=1 // pred_region
      %58 = dma.done [#allocation3], 256
    $region29: #{tpu_custom_call.1} parent=1 // pred_fallthru
      _
    // Predicated region
    $region30: #{tpu_custom_call.1} parent=1 // pred_check
      _
    $region31: #{tpu_custom_call.1} parent=1 // pred_check_branch
      %60 = sbr.rel (0) target = $region33
    $region32: #{tpu_custom_call.1} parent=1 // pred_region
      %61 = dma.done [#allocation6], 256
    $region33: #{tpu_custom_call.1} parent=1 // pred_fallthru
      _
    // Predicated region
    $region34: #{tpu_custom_call.1} parent=1 // pred_check
      _
    $region35: #{tpu_custom_call.1} parent=1 // pred_check_branch
      %63 = sbr.rel (0) target = $region37
    $region36: #{tpu_custom_call.1} parent=1 // pred_region
      %64 = dma.done [#allocation6], 512
    $region37: #{tpu_custom_call.1} parent=1 // pred_fallthru
      _
    %v65 = vld [vmem:[#allocation2] sm:$0xff]
    %v66 = vld [vmem:[#allocation2 + $0x8] sm:$0xff]
    %v67 = vld [vmem:[#allocation7] sm:$0xff]
    %v68 = vld [vmem:[#allocation7 + $0x8] sm:$0xff]
    %v69 = vld [vmem:[#allocation7 + $0x10] sm:$0xff]
    %v70 = vld [vmem:[#allocation7 + $0x18] sm:$0xff]
    %v71 = vld [vmem:[#allocation5] sm:$0xff]
    %v72 = vld [vmem:[#allocation5 + $0x8] sm:$0xff]
    %v73 = vld [vmem:[%s3] sm:$0x1]
    %v75 = vlaneseq
    %v76 = vshrl.u32 %v75, 7
    %v77 = vsub.s32 0, %v76
    %v78 = vrot.slane %v73, %v77
    %v80 = vadd.f32 %v71, %v78
    %v81 = vadd.f32 %v72, %v78
    %vm82 = vcmask 261120
    %v84 = vsel %vm82, %v65, 0
    %v87 = vsel %vm82, %v66, 0
    %89 = vmatprep.subr.mxu0 0.0
    %90 = vmatpush1.msra.mxu0 %v67
    %91 = vmatprep.subr.mxu0 0.0
    %92 = vmatpush1.msra.mxu0 %v68
    %93 = vmatprep.subr.mxu0 0.0
    %94 = vmatpush1.msra.mxu0 %v69
    %95 = vmatprep.subr.mxu0 0.0
    %96 = vmatpush1.msra.mxu0 %v70
    %97 = vmatprep.subr.mxu0 0.0
    %98 = vmatpush1.msra.mxu0 0.0
    %99 = vmatprep.subr.mxu0 0.0
    %100 = vmatpush1.msra.mxu0 0.0
    %101 = vmatprep.subr.mxu0 0.0
    %102 = vmatpush1.msra.mxu0 0.0
    %103 = vmatprep.subr.mxu0 0.0
    %104 = vmatpush1.msra.mxu0 0.0
    %105 = vmatprep.subr.mxu0 0.0
    %106 = vmatpush1.msra.mxu0 0.0
    %107 = vmatprep.subr.mxu0 0.0
    %108 = vmatpush1.msra.mxu0 0.0
    %109 = vmatprep.subr.mxu0 0.0
    %110 = vmatpush1.msra.mxu0 0.0
    %111 = vmatprep.subr.mxu0 0.0
    %112 = vmatpush1.msra.mxu0 0.0
    %113 = vmatprep.subr.mxu0 0.0
    %114 = vmatpush1.msra.mxu0 0.0
    %115 = vmatprep.subr.mxu0 0.0
    %116 = vmatpush1.msra.mxu0 0.0
    %117 = vmatprep.subr.mxu0 0.0
    %118 = vmatpush1.msra.mxu0 0.0
    %119 = vmatprep.subr.mxu0 0.0
    %120 = vmatpush1.msra.mxu0 0.0
    %121 = vmatprep.subr.mxu0 0.0
    %122 = vmatpush1.msra.mxu0 0.0
    %123 = vmatprep.subr.mxu0 0.0
    %124 = vmatpush1.msra.mxu0 0.0
    %125 = vmatprep.subr.mxu0 0.0
    %126 = vmatpush1.msra.mxu0 0.0
    %127 = vmatprep.subr.mxu0 0.0
    %128 = vmatpush1.msra.mxu0 0.0
    %129 = vmatprep.subr.mxu0 0.0
    %130 = vmatpush1.msra.mxu0 0.0
    %131 = vmatprep.subr.mxu0 0.0
    %132 = vmatpush1.msra.mxu0 0.0
    %133 = vmatprep.subr.mxu0 0.0
    %134 = vmatpush1.msra.mxu0 0.0
    %135 = vmatprep.subr.mxu0 0.0
    %136 = vmatpush1.msra.mxu0 0.0
    %137 = vmatprep.subr.mxu0 0.0
    %138 = vmatpush1.msra.mxu0 0.0
    %139 = vmatprep.subr.mxu0 0.0
    %140 = vmatpush1.msra.mxu0 0.0
    %141 = vmatprep.subr.mxu0 0.0
    %142 = vmatpush1.msra.mxu0 0.0
    %143 = vmatprep.subr.mxu0 0.0
    %144 = vmatpush1.msra.mxu0 0.0
    %145 = vmatprep.subr.mxu0 0.0
    %146 = vmatpush1.msra.mxu0 0.0
    %147 = vmatprep.subr.mxu0 0.0
    %148 = vmatpush1.msra.mxu0 0.0
    %149 = vmatprep.subr.mxu0 0.0
    %150 = vmatpush1.msra.mxu0 0.0
    %151 = vmatprep.subr.mxu0 0.0
    %152 = vmatpush1.msra.mxu0 0.0
    %153 = vmatprep.mubr.f32.mxu0 0.0
    %154 = vmatmul.mubr.f32.gmra.mrb[0].mxu0 %v84
    %v155 = vpop.f32.mrb[0].mxu0
    %v156 = vadd.f32 %v80, %v155
    %v157 = vpop.f32.mrb[0].mxu0
    %158 = vmatprep.mubr.f32.mxu0 0.0
    %159 = vmatmul.mubr.f32.gmra.mrb[0].mxu0 %v87
    %v160 = vpop.f32.mrb[0].mxu0
    %v161 = vadd.f32 %v81, %v160
    %v162 = vpop.f32.mrb[0].mxu0
    %163 = vdwg.mxu0
    %v164 = vsel %vm82, %v156, 0.0
    %165 = vadd.xlane.f32.xlu0 %v164
    %v166 = vpop.xlane.xlu0 %165
    %v167 = vsel %vm82, %v161, 0.0
    %168 = vadd.xlane.f32.xlu0 %v167
    %v169 = vpop.xlane.xlu0 %168
    %v170 = vmul.f32 %v156, %v156
    %v171 = vmul.f32 %v161, %v161
    %v172 = vsel %vm82, %v170, 0.0
    %173 = vadd.xlane.f32.xlu0 %v172
    %v174 = vpop.xlane.xlu0 %173
    %v175 = vsel %vm82, %v171, 0.0
    %176 = vadd.xlane.f32.xlu0 %v175
    %v177 = vpop.xlane.xlu0 %176
    %v178 = vmul.f32 %v166, 0.03125
    %v179 = vmul.f32 %v169, 0.03125
    %v180 = vmul.f32 %v174, 0.03125
    %v181 = vmul.f32 %v177, 0.03125
    %v182 = vmul.f32 %v178, %v178
    %v183 = vmul.f32 %v179, %v179
    %v184 = vsub.f32 %v180, %v182
    %v185 = vsub.f32 %v181, %v183
    %v186 = vmax.f32 %v184, 0.0
    %v187 = vmax.f32 %v185, 0.0
    %v188 = vsub.f32 %v156, %v178
    %v189 = vsub.f32 %v161, %v179
    %v190 = vadd.f32 %v186, 1e-12
    %v191 = vadd.f32 %v187, 1e-12
    %v192 = vrsqrt.pop %v190
    %v193 = vrsqrt.pop %v191
    %v194 = vmul.f32 %v188, %v192
    %v195 = vmul.f32 %v189, %v193
    %v196 = vld [vmem:[%s4] sm:$0x1]
    %v198 = vlaneseq
    %v199 = vshrl.u32 %v198, 7
    %v200 = vsub.s32 0, %v199
    %v201 = vrot.slane %v196, %v200
    %v203 = vmul.f32 %v194, %v201
    %v204 = vmul.f32 %v195, %v201
    %v205 = vld [vmem:[%s5] sm:$0x1]
    %v207 = vlaneseq
    %v208 = vshrl.u32 %v207, 7
    %v209 = vsub.s32 0, %v208
    %v210 = vrot.slane %v205, %v209
    %v212 = vadd.f32 %v203, %v210
    %v213 = vadd.f32 %v204, %v210
    %214 = vst.msk [vmem:[#allocation8] sm:$0xff] %vm82, %v212
    %215 = vst.msk [vmem:[#allocation8 + $0x8] sm:$0xff] %vm82, %v213
    // Predicated region
    $region38: #{tpu_custom_call.1} parent=1 // pred_check
      _
    $region39: #{tpu_custom_call.1} parent=1 // pred_check_branch
      %217 = sbr.rel (0) target = $region41
    $region40: #{tpu_custom_call.1} parent=1 // pred_region
      %s219 = ssub.s32 256, 256
      %220 = vsyncadd [#allocation4], %s219
      %s221 = sshll.u32 [#allocation8], 4
      %s222 = int_to_ptr.vmem [resolvable:$true] %s221
      %227 = dma.vmem_to_hbm [thread:$0]  %s222, 256, %s6, [#allocation4], 128, 128, 8
    $region41: #{tpu_custom_call.1} parent=1 // pred_fallthru
      _
    // Predicated region
    $region42: #{tpu_custom_call.1} parent=1 // pred_check
      _
    $region43: #{tpu_custom_call.1} parent=1 // pred_check_branch
      %229 = sbr.rel (0) target = $region45
    $region44: #{tpu_custom_call.1} parent=1 // pred_region
      %230 = dma.done [#allocation4], 256
    $region45: #{tpu_custom_call.1} parent=1 // pred_fallthru
      _
    %231 = vsyncpa [#allocation3], 1
    %232 = vsyncpa [#allocation6], 1
    %233 = vsyncpa [#allocation4], 1

</llo_original>
